<compile_context>
chip_gen: v7x
topology: tpu7x:2x2x1
jax: 0.10.0
libtpu: 0.0.40
codegen_flags: <defaults>
</compile_context>

<pallas_src>
import math
import functools

import jax
import jax.numpy as jnp
import numpy as np
from jax import lax
from jax.experimental import pallas as pl
from jax.experimental.pallas import tpu as pltpu


def _round_up(x, m):
    return ((x + m - 1) // m) * m


def _fm_kernel(idx_ref, w_ref, off_ref, prev_ref, esid_ref, epos_ref,
               bsid_ref, table_ref, out_ref, *, emb_dim):
    # idx_ref/w_ref:    (1, TB*N)  per-tile flattened indices / weights
    # off_ref/prev_ref: (1, TB*M)  end-of-bag / previous-end-of-bag offsets
    # esid_ref/epos_ref:(TB*N, 1)  per-element sample id / within-sample pos
    # bsid_ref:         (1, TB*M)  per-bag sample id
    # table_ref:        (F, D+1)   [embedding table | bias column]
    # out_ref:          (1, TB)    per-sample pairwise+linear (lane-dense)
    F_, Dp1 = table_ref.shape
    TN = idx_ref.shape[1]
    TM = off_ref.shape[1]
    TB = out_ref.shape[1]

    idx = idx_ref[...]           # (1, TN) int32
    w = w_ref[...]               # (1, TN) f32
    off = off_ref[...]           # (1, TM) int32
    prev = prev_ref[...]         # (1, TM) int32
    esid = esid_ref[...]         # (TN, 1) int32
    epos = epos_ref[...]         # (TN, 1) int32
    bsid = bsid_ref[...]         # (1, TM) int32

    # 1) One-hot gather fused with per-element weights (single MXU dot):
    #    we[t, d] = w[t] * table[idx[t], d]
    f_iota = lax.broadcasted_iota(jnp.int32, (F_, TN), 0)
    onehot_w = jnp.where(f_iota == idx, w, 0.0)                        # (F, TN)
    we = lax.dot_general(onehot_w, table_ref[...],
                         (((0,), (0,)), ((), ())),
                         preferred_element_type=jnp.float32)           # (TN, Dp1)

    # 2) Per-bag weighted sums via one block-structured membership matmul.
    #    memb[t, r] = [same sample] * ([n <= off_r] - [n <= prev_r])
    inside = ((epos <= off).astype(jnp.float32)
              - (epos <= prev).astype(jnp.float32))                    # (TN, TM)
    memb = jnp.where(esid == bsid, inside, 0.0)                        # (TN, TM)
    bag = lax.dot_general(memb, we, (((0,), (0,)), ((), ())),
                          preferred_element_type=jnp.float32)          # (TM, Dp1)

    # 3) Per-sample reductions over the M bags (two small MXU dots).
    g_iota = lax.broadcasted_iota(jnp.int32, (TB, TM), 0)
    gsum = (g_iota == bsid).astype(jnp.float32)                        # (TB, TM)
    s = jnp.dot(gsum, bag, preferred_element_type=jnp.float32)         # (TB, Dp1)
    q = jnp.dot(gsum, bag * bag, preferred_element_type=jnp.float32)   # (TB, Dp1)

    # 4) FM combine: vector lanes (d < emb_dim) give the pairwise term,
    #    the last lane (d == emb_dim) is the linear/bias term.
    d_iota = lax.broadcasted_iota(jnp.int32, (1, Dp1), 1)
    vec_mask = (d_iota < emb_dim).astype(jnp.float32)                  # (1, Dp1)
    t_mat = (0.5 * (s * s - q)) * vec_mask + s * (1.0 - vec_mask)      # (TB, Dp1)

    # 5) Lane-dense output: out[0, b] = sum_d t_mat[b, d]  (also transposes
    #    samples onto the lane axis, avoiding a (TB,1) masked store).
    ones_row = jnp.ones((1, Dp1), jnp.float32)
    out_ref[...] = lax.dot_general(ones_row, t_mat,
                                   (((1,), (1,)), ((), ())),
                                   preferred_element_type=jnp.float32)  # (1, TB)


def weighted_fm_forward(indices, weights, offsets, emb_table, bias_table,
                        bias, *, tb=None):
    """Pallas WeightedFM forward (return_l2=False path)."""
    B, N = indices.shape
    M = offsets.shape[1]
    F_, D = emb_table.shape
    Dp1 = D + 1

    if tb is None:
        tb = min(128, _round_up(max(B, 1), 8))   # samples per grid step
    b_pad = _round_up(B, tb)
    g = b_pad // tb

    indices = indices.astype(jnp.int32)
    offsets = offsets.astype(jnp.int32)
    weights = weights.astype(jnp.float32)

    # prev[b, m] = offsets[b, m-1], with -1 for m == 0 (matches the padded
    # cumsum gather-difference of the reference exactly).
    prev = jnp.concatenate(
        [jnp.full((B, 1), -1, jnp.int32), offsets[:, :-1]], axis=1)

    def pad_rows(x, fill):
        if b_pad == B:
            return x
        tail = jnp.full((b_pad - B,) + x.shape[1:], fill, x.dtype)
        return jnp.concatenate([x, tail], axis=0)

    # (G, 1, K) layout: the lane-dense row lives in the last two dims so every
    # block's last-two dims equal the full array extents for any G.
    idx_p = pad_rows(indices, 0).reshape(g, 1, tb * N)
    w_p = pad_rows(weights, 0.0).reshape(g, 1, tb * N)   # pad weight 0 => no effect
    off_p = pad_rows(offsets, 0).reshape(g, 1, tb * M)
    prev_p = pad_rows(prev, -1).reshape(g, 1, tb * M)

    # Grid-invariant id patterns (hoisted out of the kernel; constant
    # index_maps so they are never rebuilt per step).
    elem_sid = jnp.repeat(jnp.arange(tb, dtype=jnp.int32), N).reshape(tb * N, 1)
    elem_pos = jnp.tile(jnp.arange(N, dtype=jnp.int32), tb).reshape(tb * N, 1)
    bag_sid = jnp.repeat(jnp.arange(tb, dtype=jnp.int32), M).reshape(1, tb * M)

    # Embedding table with the bias embedding appended as the last lane.
    table = jnp.concatenate(
        [emb_table.astype(jnp.float32), bias_table.astype(jnp.float32)], axis=1)

    kernel = functools.partial(_fm_kernel, emb_dim=D)
    out = pl.pallas_call(
        kernel,
        out_shape=jax.ShapeDtypeStruct((g, 1, tb), jnp.float32),
        grid=(g,),
        in_specs=[
            pl.BlockSpec((None, 1, tb * N), lambda i: (i, 0, 0)),   # indices
            pl.BlockSpec((None, 1, tb * N), lambda i: (i, 0, 0)),   # weights
            pl.BlockSpec((None, 1, tb * M), lambda i: (i, 0, 0)),   # end-of-bag offsets
            pl.BlockSpec((None, 1, tb * M), lambda i: (i, 0, 0)),   # prev-bag offsets
            pl.BlockSpec((tb * N, 1), lambda i: (0, 0)),            # element sample id
            pl.BlockSpec((tb * N, 1), lambda i: (0, 0)),            # element position
            pl.BlockSpec((1, tb * M), lambda i: (0, 0)),            # bag sample id
            pl.BlockSpec((F_, Dp1), lambda i: (0, 0)),              # [emb | bias] table
        ],
        out_specs=pl.BlockSpec((None, 1, tb), lambda i: (i, 0, 0)),
        compiler_params=pltpu.CompilerParams(
            dimension_semantics=("parallel",)),   # batch tiles are independent
    )(idx_p, w_p, off_p, prev_p, elem_sid, elem_pos, bag_sid, table)

    return out.reshape(b_pad)[:B] + bias


# ---------------- pure-JAX reference mirroring the PyTorch module ----------
def _batch_gather(x, off):
    B_, _, Dd = x.shape
    i = jnp.arange(B_)[:, None, None]
    j = off[:, :, None]
    k = jnp.arange(Dd)[None, None, :]
    return x[i, j, k]


def _ref_bag(table, idx, w, off):
    emb = table[idx]                                   # (B, N, D)
    we = emb * w[..., None]
    padded = jnp.concatenate([jnp.zeros_like(we[:, :1]), we], axis=1)
    cum = jnp.cumsum(padded, axis=1)                   # (B, N+1, D)
    po = jnp.concatenate(
        [-jnp.ones_like(off[:, :1]), off], axis=1) + 1  # (B, M+1)
    return _batch_gather(cum, po[:, 1:]) - _batch_gather(cum, po[:, :-1])


def reference_fm(indices, weights, offsets, emb_table, bias_table, bias):
    vectors = _ref_bag(emb_table, indices, weights, offsets)          # (B, M, D)
    biases = _ref_bag(bias_table, indices, weights, offsets)[..., 0]  # (B, M)
    square_of_sum = jnp.square(vectors.sum(axis=1))
    sum_of_square = jnp.square(vectors).sum(axis=1)
    pairwise = 0.5 * (square_of_sum - sum_of_square).sum(axis=1)
    linear = biases.sum(axis=1)
    return pairwise + linear + bias


if __name__ == "__main__":
    key = jax.random.PRNGKey(0)
    B, N, M = 2, 8, 4
    num_features, D = 32, 8

    k1, k2, k3, k4 = jax.random.split(key, 4)
    vec_init_scale = 1.0 / math.sqrt(D)
    emb_table = jax.random.uniform(
        k1, (num_features, D), jnp.float32, 0.0, vec_init_scale)
    # The module zero-inits the bias embeddings; use nonzero values here so
    # the linear/bias path is actually validated (forward math is identical).
    bias_table = jax.random.uniform(
        k4, (num_features, 1), jnp.float32, -0.1, 0.1)
    global_bias = jnp.float32(0.25)

    indices = jax.random.randint(k2, (B, N), 0, num_features, dtype=jnp.int32)
    weights = jax.random.uniform(k3, (B, N), jnp.float32)
    offsets = jnp.array([[1, 3, 5, 7],
                         [0, 2, 4, 7]], dtype=jnp.int32)      # end-of-bag idx

    out = weighted_fm_forward(indices, weights, offsets,
                              emb_table, bias_table, global_bias)
    out = jax.block_until_ready(out)

    ref = reference_fm(indices, weights, offsets,
                       emb_table, bias_table, global_bias)
    # Tolerance covers default (single-pass bf16) MXU precision; all 0/1
    # mask operands are exact in bf16.
    np.testing.assert_allclose(np.asarray(out), np.asarray(ref),
                               rtol=2e-2, atol=2e-2)
    print("KERNEL_OK")
</pallas_src>

<mosaic_0001>
module attributes {stable_mosaic.version = 11 : i64} {
  func.func @_fm_kernel(%arg0: i32, %arg1: memref<1x1x64xi32, #tpu.memory_space<vmem>>, %arg2: memref<1x1x64xf32, #tpu.memory_space<vmem>>, %arg3: memref<1x1x32xi32, #tpu.memory_space<vmem>>, %arg4: memref<1x1x32xi32, #tpu.memory_space<vmem>>, %arg5: memref<64x1xi32, #tpu.memory_space<vmem>>, %arg6: memref<64x1xi32, #tpu.memory_space<vmem>>, %arg7: memref<1x32xi32, #tpu.memory_space<vmem>>, %arg8: memref<32x9xf32, #tpu.memory_space<vmem>>, %arg9: memref<1x1x8xf32, #tpu.memory_space<vmem>>) attributes {dimension_semantics = [#tpu.dimension_semantics<parallel>], iteration_bounds = array<i64: 1>, scalar_prefetch = 0 : i64, scratch_operands = 0 : i64, tpu.core_type = #tpu.core_type<tc>, window_params = [{transform_indices = @transform_0, window_bounds = array<i64: 1, 1, 64>}, {transform_indices = @transform_1, window_bounds = array<i64: 1, 1, 64>}, {transform_indices = @transform_2, window_bounds = array<i64: 1, 1, 32>}, {transform_indices = @transform_3, window_bounds = array<i64: 1, 1, 32>}, {pipeline_mode = #tpu.pipeline_mode<synchronous>, transform_indices = @transform_4, window_bounds = array<i64: 64, 1>}, {pipeline_mode = #tpu.pipeline_mode<synchronous>, transform_indices = @transform_5, window_bounds = array<i64: 64, 1>}, {pipeline_mode = #tpu.pipeline_mode<synchronous>, transform_indices = @transform_6, window_bounds = array<i64: 1, 32>}, {pipeline_mode = #tpu.pipeline_mode<synchronous>, transform_indices = @transform_7, window_bounds = array<i64: 32, 9>}, {transform_indices = @transform_8, window_bounds = array<i64: 1, 1, 8>}]} {
    %c0 = arith.constant 0 : index
    %c0_0 = arith.constant 0 : index
    %c0_1 = arith.constant 0 : index
    %0 = vector.load %arg1[%c0, %c0_0, %c0_1] : memref<1x1x64xi32, #tpu.memory_space<vmem>>, vector<1x1x64xi32>
    %1 = vector.shape_cast %0 : vector<1x1x64xi32> to vector<1x64xi32>
    %c0_2 = arith.constant 0 : index
    %c0_3 = arith.constant 0 : index
    %c0_4 = arith.constant 0 : index
    %2 = vector.load %arg2[%c0_2, %c0_3, %c0_4] : memref<1x1x64xf32, #tpu.memory_space<vmem>>, vector<1x1x64xf32>
    %3 = vector.shape_cast %2 : vector<1x1x64xf32> to vector<1x64xf32>
    %c0_5 = arith.constant 0 : index
    %c0_6 = arith.constant 0 : index
    %c0_7 = arith.constant 0 : index
    %4 = vector.load %arg3[%c0_5, %c0_6, %c0_7] : memref<1x1x32xi32, #tpu.memory_space<vmem>>, vector<1x1x32xi32>
    %5 = vector.shape_cast %4 : vector<1x1x32xi32> to vector<1x32xi32>
    %c0_8 = arith.constant 0 : index
    %c0_9 = arith.constant 0 : index
    %c0_10 = arith.constant 0 : index
    %6 = vector.load %arg4[%c0_8, %c0_9, %c0_10] : memref<1x1x32xi32, #tpu.memory_space<vmem>>, vector<1x1x32xi32>
    %7 = vector.shape_cast %6 : vector<1x1x32xi32> to vector<1x32xi32>
    %c0_11 = arith.constant 0 : index
    %c0_12 = arith.constant 0 : index
    %8 = vector.load %arg5[%c0_11, %c0_12] : memref<64x1xi32, #tpu.memory_space<vmem>>, vector<64x1xi32>
    %c0_13 = arith.constant 0 : index
    %c0_14 = arith.constant 0 : index
    %9 = vector.load %arg6[%c0_13, %c0_14] : memref<64x1xi32, #tpu.memory_space<vmem>>, vector<64x1xi32>
    %c0_15 = arith.constant 0 : index
    %c0_16 = arith.constant 0 : index
    %10 = vector.load %arg7[%c0_15, %c0_16] : memref<1x32xi32, #tpu.memory_space<vmem>>, vector<1x32xi32>
    %11 = tpu.iota {dimensions = array<i32: 0>} : vector<32x64xi32>
    %12 = vector.broadcast %1 : vector<1x64xi32> to vector<32x64xi32>
    %13 = arith.cmpi eq, %11, %12 : vector<32x64xi32>
    %cst = arith.constant 0.000000e+00 : f32
    %14 = vector.shape_cast %3 : vector<1x64xf32> to vector<1x64xf32>
    %15 = vector.broadcast %14 : vector<1x64xf32> to vector<32x64xf32>
    %16 = vector.broadcast %cst : f32 to vector<32x64xf32>
    %17 = arith.select %13, %15, %16 : vector<32x64xi1>, vector<32x64xf32>
    %c0_17 = arith.constant 0 : index
    %c0_18 = arith.constant 0 : index
    %18 = vector.load %arg8[%c0_17, %c0_18] : memref<32x9xf32, #tpu.memory_space<vmem>>, vector<32x9xf32>
    %cst_19 = arith.constant dense<0.000000e+00> : vector<64x9xf32>
    %19 = tpu.matmul %17, %18, %cst_19 {dimension_numbers = #tpu.dot_dimension_numbers<[0], [0], [1], [1], [0, 1, 1, 1], [], []>} : vector<32x64xf32>, vector<32x9xf32>, vector<64x9xf32> -> vector<64x9xf32>
    %20 = vector.broadcast %9 : vector<64x1xi32> to vector<64x32xi32>
    %21 = vector.broadcast %5 : vector<1x32xi32> to vector<64x32xi32>
    %22 = arith.cmpi sle, %20, %21 : vector<64x32xi32>
    %23 = arith.extui %22 : vector<64x32xi1> to vector<64x32xi32>
    %24 = arith.sitofp %23 : vector<64x32xi32> to vector<64x32xf32>
    %25 = vector.broadcast %9 : vector<64x1xi32> to vector<64x32xi32>
    %26 = vector.broadcast %7 : vector<1x32xi32> to vector<64x32xi32>
    %27 = arith.cmpi sle, %25, %26 : vector<64x32xi32>
    %28 = arith.extui %27 : vector<64x32xi1> to vector<64x32xi32>
    %29 = arith.sitofp %28 : vector<64x32xi32> to vector<64x32xf32>
    %30 = arith.subf %24, %29 : vector<64x32xf32>
    %31 = vector.broadcast %8 : vector<64x1xi32> to vector<64x32xi32>
    %32 = vector.broadcast %10 : vector<1x32xi32> to vector<64x32xi32>
    %33 = arith.cmpi eq, %31, %32 : vector<64x32xi32>
    %cst_20 = arith.constant 0.000000e+00 : f32
    %34 = vector.broadcast %cst_20 : f32 to vector<64x32xf32>
    %35 = arith.select %33, %30, %34 : vector<64x32xi1>, vector<64x32xf32>
    %cst_21 = arith.constant dense<0.000000e+00> : vector<32x9xf32>
    %36 = tpu.matmul %35, %19, %cst_21 {dimension_numbers = #tpu.dot_dimension_numbers<[0], [0], [1], [1], [0, 1, 1, 1], [], []>} : vector<64x32xf32>, vector<64x9xf32>, vector<32x9xf32> -> vector<32x9xf32>
    %37 = tpu.iota {dimensions = array<i32: 0>} : vector<8x32xi32>
    %38 = vector.broadcast %10 : vector<1x32xi32> to vector<8x32xi32>
    %39 = arith.cmpi eq, %37, %38 : vector<8x32xi32>
    %40 = arith.extui %39 : vector<8x32xi1> to vector<8x32xi32>
    %41 = arith.sitofp %40 : vector<8x32xi32> to vector<8x32xf32>
    %cst_22 = arith.constant dense<0.000000e+00> : vector<8x9xf32>
    %42 = tpu.matmul %41, %36, %cst_22 {dimension_numbers = #tpu.dot_dimension_numbers<[1], [0], [0], [1], [0, 0, 1, 1], [], []>} : vector<8x32xf32>, vector<32x9xf32>, vector<8x9xf32> -> vector<8x9xf32>
    %43 = arith.mulf %36, %36 : vector<32x9xf32>
    %cst_23 = arith.constant dense<0.000000e+00> : vector<8x9xf32>
    %44 = tpu.matmul %41, %43, %cst_23 {dimension_numbers = #tpu.dot_dimension_numbers<[1], [0], [0], [1], [0, 0, 1, 1], [], []>} : vector<8x32xf32>, vector<32x9xf32>, vector<8x9xf32> -> vector<8x9xf32>
    %45 = tpu.iota {dimensions = array<i32: 1>} : vector<1x9xi32>
    %c8_i32 = arith.constant 8 : i32
    %46 = vector.broadcast %c8_i32 : i32 to vector<1x9xi32>
    %47 = arith.cmpi slt, %45, %46 : vector<1x9xi32>
    %48 = arith.extui %47 : vector<1x9xi1> to vector<1x9xi32>
    %49 = arith.sitofp %48 : vector<1x9xi32> to vector<1x9xf32>
    %50 = arith.mulf %42, %42 : vector<8x9xf32>
    %51 = arith.subf %50, %44 : vector<8x9xf32>
    %cst_24 = arith.constant 5.000000e-01 : f32
    %52 = vector.broadcast %cst_24 : f32 to vector<8x9xf32>
    %53 = arith.mulf %52, %51 : vector<8x9xf32>
    %54 = vector.broadcast %49 : vector<1x9xf32> to vector<8x9xf32>
    %55 = arith.mulf %53, %54 : vector<8x9xf32>
    %cst_25 = arith.constant 1.000000e+00 : f32
    %56 = vector.broadcast %cst_25 : f32 to vector<1x9xf32>
    %57 = arith.subf %56, %49 : vector<1x9xf32>
    %58 = vector.broadcast %57 : vector<1x9xf32> to vector<8x9xf32>
    %59 = arith.mulf %42, %58 : vector<8x9xf32>
    %60 = arith.addf %55, %59 : vector<8x9xf32>
    %cst_26 = arith.constant 1.000000e+00 : f32
    %61 = vector.broadcast %cst_26 : f32 to vector<1x9xf32>
    %cst_27 = arith.constant dense<0.000000e+00> : vector<1x8xf32>
    %62 = tpu.matmul %61, %60, %cst_27 {dimension_numbers = #tpu.dot_dimension_numbers<[1], [1], [0], [0], [0, 0, 1, 0], [], []>} : vector<1x9xf32>, vector<8x9xf32>, vector<1x8xf32> -> vector<1x8xf32>
    %c0_28 = arith.constant 0 : index
    %c0_29 = arith.constant 0 : index
    %c0_30 = arith.constant 0 : index
    %63 = vector.load %arg9[%c0_28, %c0_29, %c0_30] : memref<1x1x8xf32, #tpu.memory_space<vmem>>, vector<1x1x8xf32>
    %64 = vector.shape_cast %63 : vector<1x1x8xf32> to vector<1x8xf32>
    %65 = vector.shape_cast %62 : vector<1x8xf32> to vector<1x1x8xf32>
    tpu.vector_store %arg9[%c0_28, %c0_29, %c0_30], %65 {strides = array<i32>} : memref<1x1x8xf32, #tpu.memory_space<vmem>>, vector<1x1x8xf32>,
    return
  }
  func.func @transform_0(%arg0: i32) -> (i32, i32, i32) {
    %c0_i32 = arith.constant 0 : i32
    %c0_i32_0 = arith.constant 0 : i32
    %c0_i32_1 = arith.constant 0 : i32
    return %arg0, %c0_i32, %c0_i32_0 : i32, i32, i32
  }
  func.func @transform_1(%arg0: i32) -> (i32, i32, i32) {
    %c0_i32 = arith.constant 0 : i32
    %c0_i32_0 = arith.constant 0 : i32
    %c0_i32_1 = arith.constant 0 : i32
    return %arg0, %c0_i32, %c0_i32_0 : i32, i32, i32
  }
  func.func @transform_2(%arg0: i32) -> (i32, i32, i32) {
    %c0_i32 = arith.constant 0 : i32
    %c0_i32_0 = arith.constant 0 : i32
    %c0_i32_1 = arith.constant 0 : i32
    return %arg0, %c0_i32, %c0_i32_0 : i32, i32, i32
  }
  func.func @transform_3(%arg0: i32) -> (i32, i32, i32) {
    %c0_i32 = arith.constant 0 : i32
    %c0_i32_0 = arith.constant 0 : i32
    %c0_i32_1 = arith.constant 0 : i32
    return %arg0, %c0_i32, %c0_i32_0 : i32, i32, i32
  }
  func.func @transform_4(%arg0: i32) -> (i32, i32) {
    %c0_i32 = arith.constant 0 : i32
    %c0_i32_0 = arith.constant 0 : i32
    %c0_i32_1 = arith.constant 0 : i32
    return %c0_i32, %c0_i32_0 : i32, i32
  }
  func.func @transform_5(%arg0: i32) -> (i32, i32) {
    %c0_i32 = arith.constant 0 : i32
    %c0_i32_0 = arith.constant 0 : i32
    %c0_i32_1 = arith.constant 0 : i32
    return %c0_i32, %c0_i32_0 : i32, i32
  }
  func.func @transform_6(%arg0: i32) -> (i32, i32) {
    %c0_i32 = arith.constant 0 : i32
    %c0_i32_0 = arith.constant 0 : i32
    %c0_i32_1 = arith.constant 0 : i32
    return %c0_i32, %c0_i32_0 : i32, i32
  }
  func.func @transform_7(%arg0: i32) -> (i32, i32) {
    %c0_i32 = arith.constant 0 : i32
    %c0_i32_0 = arith.constant 0 : i32
    %c0_i32_1 = arith.constant 0 : i32
    return %c0_i32, %c0_i32_0 : i32, i32
  }
  func.func @transform_8(%arg0: i32) -> (i32, i32, i32) {
    %c0_i32 = arith.constant 0 : i32
    %c0_i32_0 = arith.constant 0 : i32
    %c0_i32_1 = arith.constant 0 : i32
    return %arg0, %c0_i32, %c0_i32_0 : i32, i32, i32
  }
}

</mosaic_0001>

<llo_original>
// kernel: tpu_custom_call.1
$region0: #{tpu_custom_call.1}
  #allocation0 [shape = 'u32[]', space=smem, size = 0x4, offset = 0x4, fixed_abs, tag = 'smem constant byte address 0x4 - core index']
  #allocation1 [shape = 'u32[144,128]{1,0:T(1,128)}', space=vmem, size = 0x12000, scoped, tag = 'internal scratch']
  %s0 = inlined_call_operand.vmem [shape: s32[1,1,64], index: 0, kind: input, shape index: {}]
  %s1 = inlined_call_operand.vmem [shape: f32[1,1,64], index: 1, kind: input, shape index: {}]
  %s2 = inlined_call_operand.vmem [shape: s32[1,1,32], index: 2, kind: input, shape index: {}]
  %s3 = inlined_call_operand.vmem [shape: s32[1,1,32], index: 3, kind: input, shape index: {}]
  %s4 = inlined_call_operand.vmem [shape: s32[64,1], index: 4, kind: input, shape index: {}]
  %s5 = inlined_call_operand.vmem [shape: s32[64,1], index: 5, kind: input, shape index: {}]
  %s6 = inlined_call_operand.vmem [shape: s32[1,32], index: 6, kind: input, shape index: {}]
  %s7 = inlined_call_operand.vmem [shape: f32[32,9], index: 7, kind: input, shape index: {}]
  %s8 = inlined_call_operand.hbm [shape: f32[1,1,8], index: 8, kind: output, shape index: {}]
  %s9 = sld [smem:[#allocation0]]
  $region42: #{tpu_custom_call.1} parent=0
    _
  %s11 = ssub.s32 1, %s9
  %s12 = scalar_select 0, %s11, %s9
  $region1: #{tpu_custom_call.1} parent=0
    #allocation2 [shape = 'u8[512]{0}', space=vmem, size = 0x400, scoped, tag = 'output window, operand 0, single buffered']
    #allocation3 [shape = 's32[1]{0}', space=sflag, size = 0x4, scoped, tag = 'scoped memory for tpu_custom_call.1']
    %13 = vsyncpa [#allocation3], 0
    // Predicated region
    $region2: #{tpu_custom_call.1} parent=1 // pred_check
      _
    $region3: #{tpu_custom_call.1} parent=1 // pred_check_branch
      %15 = sbr.rel (0) target = $region5
    $region4: #{tpu_custom_call.1} parent=1 // pred_region
      _
    $region5: #{tpu_custom_call.1} parent=1 // pred_fallthru
      _
    // Predicated region
    $region6: #{tpu_custom_call.1} parent=1 // pred_check
      _
    $region7: #{tpu_custom_call.1} parent=1 // pred_check_branch
      %17 = sbr.rel (0) target = $region9
    $region8: #{tpu_custom_call.1} parent=1 // pred_region
      _
    $region9: #{tpu_custom_call.1} parent=1 // pred_fallthru
      _
    // Predicated region
    $region10: #{tpu_custom_call.1} parent=1 // pred_check
      _
    $region11: #{tpu_custom_call.1} parent=1 // pred_check_branch
      %19 = sbr.rel (0) target = $region13
    $region12: #{tpu_custom_call.1} parent=1 // pred_region
      _
    $region13: #{tpu_custom_call.1} parent=1 // pred_fallthru
      _
    // Predicated region
    $region14: #{tpu_custom_call.1} parent=1 // pred_check
      _
    $region15: #{tpu_custom_call.1} parent=1 // pred_check_branch
      %21 = sbr.rel (0) target = $region17
    $region16: #{tpu_custom_call.1} parent=1 // pred_region
      _
    $region17: #{tpu_custom_call.1} parent=1 // pred_fallthru
      _
    // Predicated region
    $region18: #{tpu_custom_call.1} parent=1 // pred_check
      _
    $region19: #{tpu_custom_call.1} parent=1 // pred_check_branch
      %23 = sbr.rel (0) target = $region21
    $region20: #{tpu_custom_call.1} parent=1 // pred_region
      _
    $region21: #{tpu_custom_call.1} parent=1 // pred_fallthru
      _
    // Predicated region
    $region22: #{tpu_custom_call.1} parent=1 // pred_check
      _
    $region23: #{tpu_custom_call.1} parent=1 // pred_check_branch
      %25 = sbr.rel (0) target = $region25
    $region24: #{tpu_custom_call.1} parent=1 // pred_region
      _
    $region25: #{tpu_custom_call.1} parent=1 // pred_fallthru
      _
    // Predicated region
    $region26: #{tpu_custom_call.1} parent=1 // pred_check
      _
    $region27: #{tpu_custom_call.1} parent=1 // pred_check_branch
      %27 = sbr.rel (0) target = $region29
    $region28: #{tpu_custom_call.1} parent=1 // pred_region
      _
    $region29: #{tpu_custom_call.1} parent=1 // pred_fallthru
      _
    // Predicated region
    $region30: #{tpu_custom_call.1} parent=1 // pred_check
      _
    $region31: #{tpu_custom_call.1} parent=1 // pred_check_branch
      %29 = sbr.rel (0) target = $region33
    $region32: #{tpu_custom_call.1} parent=1 // pred_region
      _
    $region33: #{tpu_custom_call.1} parent=1 // pred_fallthru
      _
    %v30 = vld [vmem:[%s0] sm:$0x1]
    %v31 = vld [vmem:[%s1] sm:$0x1]
    %v32 = vld [vmem:[%s2] sm:$0x1]
    %v33 = vld [vmem:[%s3] sm:$0x1]
    %v34 = vld [vmem:[%s4] sm:$0xff]
    %v35 = vld [vmem:[%s4 + $0x8] sm:$0xff]
    %v36 = vld [vmem:[%s4 + $0x10] sm:$0xff]
    %v37 = vld [vmem:[%s4 + $0x18] sm:$0xff]
    %v38 = vld [vmem:[%s4 + $0x20] sm:$0xff]
    %v39 = vld [vmem:[%s4 + $0x28] sm:$0xff]
    %v40 = vld [vmem:[%s4 + $0x30] sm:$0xff]
    %v41 = vld [vmem:[%s4 + $0x38] sm:$0xff]
    %v42 = vld [vmem:[%s5] sm:$0xff]
    %v43 = vld [vmem:[%s5 + $0x8] sm:$0xff]
    %v44 = vld [vmem:[%s5 + $0x10] sm:$0xff]
    %v45 = vld [vmem:[%s5 + $0x18] sm:$0xff]
    %v46 = vld [vmem:[%s5 + $0x20] sm:$0xff]
    %v47 = vld [vmem:[%s5 + $0x28] sm:$0xff]
    %v48 = vld [vmem:[%s5 + $0x30] sm:$0xff]
    %v49 = vld [vmem:[%s5 + $0x38] sm:$0xff]
    %v50 = vld [vmem:[%s6] sm:$0x1]
    %v51 = vlaneseq
    %v52 = vshrl.u32 %v51, 7
    %v53 = vadd.s32 %v52, 8
    %v54 = vadd.s32 %v52, 16
    %v55 = vadd.s32 %v52, 24
    %v56 = vlaneseq
    %v57 = vshrl.u32 %v56, 7
    %v58 = vsub.s32 0, %v57
    %v59 = vrot.slane %v30, %v58
    %vm60 = vcmp.eq.s32.totalorder %v52, %v59
    %vm61 = vcmp.eq.s32.totalorder %v53, %v59
    %vm62 = vcmp.eq.s32.totalorder %v54, %v59
    %vm63 = vcmp.eq.s32.totalorder %v55, %v59
    %v65 = vlaneseq
    %v66 = vshrl.u32 %v65, 7
    %v67 = vsub.s32 0, %v66
    %v68 = vrot.slane %v31, %v67
    %v70 = vsel %vm60, %v68, 0.0
    %v71 = vsel %vm61, %v68, 0.0
    %v72 = vsel %vm62, %v68, 0.0
    %v73 = vsel %vm63, %v68, 0.0
    %v74 = vld [vmem:[%s7] sm:$0xff]
    %v75 = vld [vmem:[%s7 + $0x8] sm:$0xff]
    %v76 = vld [vmem:[%s7 + $0x10] sm:$0xff]
    %v77 = vld [vmem:[%s7 + $0x18] sm:$0xff]
    %78 = vxpose.xlu0.b32.start [1/16] %v70, 128
    %79 = vxpose.xlu0.b32.cont [2/16] %v71, 128
    %80 = vxpose.xlu0.b32.cont [3/16] %v72, 128
    %81 = vxpose.xlu0.b32.cont [4/16] %v73, 128
    %82 = vxpose.xlu0.b32.cont [5/16] 0.0, 128
    %83 = vxpose.xlu0.b32.cont [6/16] 0.0, 128
    %84 = vxpose.xlu0.b32.cont [7/16] 0.0, 128
    %85 = vxpose.xlu0.b32.cont [8/16] 0.0, 128
    %86 = vxpose.xlu0.b32.cont [9/16] 0.0, 128
    %87 = vxpose.xlu0.b32.cont [10/16] 0.0, 128
    %88 = vxpose.xlu0.b32.cont [11/16] 0.0, 128
    %89 = vxpose.xlu0.b32.cont [12/16] 0.0, 128
    %90 = vxpose.xlu0.b32.cont [13/16] 0.0, 128
    %91 = vxpose.xlu0.b32.cont [14/16] 0.0, 128
    %92 = vxpose.xlu0.b32.cont [15/16] 0.0, 128
    %93 = vxpose.xlu0.b32.end [16/16] 0.0, 128
    %v94 = vpop.trf.xlu0
    %v95 = vpop.trf.xlu0
    %v96 = vpop.trf.xlu0
    %v97 = vpop.trf.xlu0
    %v98 = vpop.trf.xlu0
    %v99 = vpop.trf.xlu0
    %v100 = vpop.trf.xlu0
    %v101 = vpop.trf.xlu0
    %v102 = vpop.trf.xlu0
    %v103 = vpop.trf.xlu0
    %v104 = vpop.trf.xlu0
    %v105 = vpop.trf.xlu0
    %v106 = vpop.trf.xlu0
    %v107 = vpop.trf.xlu0
    %v108 = vpop.trf.xlu0
    %v109 = vpop.trf.xlu0
    %vm110 = vcmask 261120
    %v112 = vsel %vm110, %v94, 0
    %v115 = vsel %vm110, %v95, 0
    %v118 = vsel %vm110, %v96, 0
    %v121 = vsel %vm110, %v97, 0
    %v124 = vsel %vm110, %v98, 0
    %v127 = vsel %vm110, %v99, 0
    %v130 = vsel %vm110, %v100, 0
    %v133 = vsel %vm110, %v101, 0
    %135 = vmatprep.subr.mxu0 0.0
    %136 = vmatpush1.msra.mxu0 %v74
    %137 = vmatprep.subr.mxu0 0.0
    %138 = vmatpush1.msra.mxu0 %v75
    %139 = vmatprep.subr.mxu0 0.0
    %140 = vmatpush1.msra.mxu0 %v76
    %141 = vmatprep.subr.mxu0 0.0
    %142 = vmatpush1.msra.mxu0 %v77
    %143 = vmatprep.subr.mxu0 0.0
    %144 = vmatpush1.msra.mxu0 0.0
    %145 = vmatprep.subr.mxu0 0.0
    %146 = vmatpush1.msra.mxu0 0.0
    %147 = vmatprep.subr.mxu0 0.0
    %148 = vmatpush1.msra.mxu0 0.0
    %149 = vmatprep.subr.mxu0 0.0
    %150 = vmatpush1.msra.mxu0 0.0
    %151 = vmatprep.subr.mxu0 0.0
    %152 = vmatpush1.msra.mxu0 0.0
    %153 = vmatprep.subr.mxu0 0.0
    %154 = vmatpush1.msra.mxu0 0.0
    %155 = vmatprep.subr.mxu0 0.0
    %156 = vmatpush1.msra.mxu0 0.0
    %157 = vmatprep.subr.mxu0 0.0
    %158 = vmatpush1.msra.mxu0 0.0
    %159 = vmatprep.subr.mxu0 0.0
    %160 = vmatpush1.msra.mxu0 0.0
    %161 = vmatprep.subr.mxu0 0.0
    %162 = vmatpush1.msra.mxu0 0.0
    %163 = vmatprep.subr.mxu0 0.0
    %164 = vmatpush1.msra.mxu0 0.0
    %165 = vmatprep.subr.mxu0 0.0
    %166 = vmatpush1.msra.mxu0 0.0
    %167 = vmatprep.subr.mxu0 0.0
    %168 = vmatpush1.msra.mxu0 0.0
    %169 = vmatprep.subr.mxu0 0.0
    %170 = vmatpush1.msra.mxu0 0.0
    %171 = vmatprep.subr.mxu0 0.0
    %172 = vmatpush1.msra.mxu0 0.0
    %173 = vmatprep.subr.mxu0 0.0
    %174 = vmatpush1.msra.mxu0 0.0
    %175 = vmatprep.subr.mxu0 0.0
    %176 = vmatpush1.msra.mxu0 0.0
    %177 = vmatprep.subr.mxu0 0.0
    %178 = vmatpush1.msra.mxu0 0.0
    %179 = vmatprep.subr.mxu0 0.0
    %180 = vmatpush1.msra.mxu0 0.0
    %181 = vmatprep.subr.mxu0 0.0
    %182 = vmatpush1.msra.mxu0 0.0
    %183 = vmatprep.subr.mxu0 0.0
    %184 = vmatpush1.msra.mxu0 0.0
    %185 = vmatprep.subr.mxu0 0.0
    %186 = vmatpush1.msra.mxu0 0.0
    %187 = vmatprep.subr.mxu0 0.0
    %188 = vmatpush1.msra.mxu0 0.0
    %189 = vmatprep.subr.mxu0 0.0
    %190 = vmatpush1.msra.mxu0 0.0
    %191 = vmatprep.subr.mxu0 0.0
    %192 = vmatpush1.msra.mxu0 0.0
    %193 = vmatprep.subr.mxu0 0.0
    %194 = vmatpush1.msra.mxu0 0.0
    %195 = vmatprep.subr.mxu0 0.0
    %196 = vmatpush1.msra.mxu0 0.0
    %197 = vmatprep.subr.mxu0 0.0
    %198 = vmatpush1.msra.mxu0 0.0
    %199 = vmatprep.mubr.f32.mxu0 0.0
    %200 = vmatmul.mubr.f32.gmra.mrb[0].mxu0 %v112
    %v201 = vpop.f32.mrb[0].mxu0
    %v202 = vadd.f32 0.0, %v201
    %v203 = vpop.f32.mrb[0].mxu0
    %204 = vmatprep.mubr.f32.mxu0 0.0
    %205 = vmatmul.mubr.f32.gmra.mrb[0].mxu0 %v115
    %v206 = vpop.f32.mrb[0].mxu0
    %v207 = vadd.f32 0.0, %v206
    %v208 = vpop.f32.mrb[0].mxu0
    %209 = vmatprep.mubr.f32.mxu0 0.0
    %210 = vmatmul.mubr.f32.gmra.mrb[0].mxu0 %v118
    %v211 = vpop.f32.mrb[0].mxu0
    %v212 = vadd.f32 0.0, %v211
    %v213 = vpop.f32.mrb[0].mxu0
    %214 = vmatprep.mubr.f32.mxu0 0.0
    %215 = vmatmul.mubr.f32.gmra.mrb[0].mxu0 %v121
    %v216 = vpop.f32.mrb[0].mxu0
    %v217 = vadd.f32 0.0, %v216
    %v218 = vpop.f32.mrb[0].mxu0
    %219 = vmatprep.mubr.f32.mxu0 0.0
    %220 = vmatmul.mubr.f32.gmra.mrb[0].mxu0 %v124
    %v221 = vpop.f32.mrb[0].mxu0
    %v222 = vadd.f32 0.0, %v221
    %v223 = vpop.f32.mrb[0].mxu0
    %224 = vmatprep.mubr.f32.mxu0 0.0
    %225 = vmatmul.mubr.f32.gmra.mrb[0].mxu0 %v127
    %v226 = vpop.f32.mrb[0].mxu0
    %v227 = vadd.f32 0.0, %v226
    %v228 = vpop.f32.mrb[0].mxu0
    %229 = vmatprep.mubr.f32.mxu0 0.0
    %230 = vmatmul.mubr.f32.gmra.mrb[0].mxu0 %v130
    %v231 = vpop.f32.mrb[0].mxu0
    %v232 = vadd.f32 0.0, %v231
    %v233 = vpop.f32.mrb[0].mxu0
    %234 = vmatprep.mubr.f32.mxu0 0.0
    %235 = vmatmul.mubr.f32.gmra.mrb[0].mxu0 %v133
    %v236 = vpop.f32.mrb[0].mxu0
    %v237 = vadd.f32 0.0, %v236
    %v238 = vpop.f32.mrb[0].mxu0
    %239 = vdwg.mxu0
    %240 = vset.pattern.permute.xlu0 0
    %241 = vperm.xlu0 %240, %v42
    %v242 = vpop.permute.xlu0 %241
    %243 = vset.pattern.permute.xlu0 0
    %244 = vperm.xlu0 %243, %v43
    %v245 = vpop.permute.xlu0 %244
    %246 = vset.pattern.permute.xlu0 0
    %247 = vperm.xlu0 %246, %v44
    %v248 = vpop.permute.xlu0 %247
    %249 = vset.pattern.permute.xlu0 0
    %250 = vperm.xlu0 %249, %v45
    %v251 = vpop.permute.xlu0 %250
    %252 = vset.pattern.permute.xlu0 0
    %253 = vperm.xlu0 %252, %v46
    %v254 = vpop.permute.xlu0 %253
    %255 = vset.pattern.permute.xlu0 0
    %256 = vperm.xlu0 %255, %v47
    %v257 = vpop.permute.xlu0 %256
    %258 = vset.pattern.permute.xlu0 0
    %259 = vperm.xlu0 %258, %v48
    %v260 = vpop.permute.xlu0 %259
    %261 = vset.pattern.permute.xlu0 0
    %262 = vperm.xlu0 %261, %v49
    %v263 = vpop.permute.xlu0 %262
    %v264 = vlaneseq
    %v265 = vshrl.u32 %v264, 7
    %v266 = vsub.s32 0, %v265
    %v267 = vrot.slane %v32, %v266
    %vm268 = vcmp.le.s32.totalorder %v242, %v267
    %vm269 = vcmp.le.s32.totalorder %v245, %v267
    %vm270 = vcmp.le.s32.totalorder %v248, %v267
    %vm271 = vcmp.le.s32.totalorder %v251, %v267
    %vm272 = vcmp.le.s32.totalorder %v254, %v267
    %vm273 = vcmp.le.s32.totalorder %v257, %v267
    %vm274 = vcmp.le.s32.totalorder %v260, %v267
    %vm275 = vcmp.le.s32.totalorder %v263, %v267
    %v276 = vsel %vm268, 1, 0
    %v277 = vsel %vm269, 1, 0
    %v278 = vsel %vm270, 1, 0
    %v279 = vsel %vm271, 1, 0
    %v280 = vsel %vm272, 1, 0
    %v281 = vsel %vm273, 1, 0
    %v282 = vsel %vm274, 1, 0
    %v283 = vsel %vm275, 1, 0
    %v284 = vcvt.s32.f32 %v276
    %v285 = vcvt.s32.f32 %v277
    %v286 = vcvt.s32.f32 %v278
    %v287 = vcvt.s32.f32 %v279
    %v288 = vcvt.s32.f32 %v280
    %v289 = vcvt.s32.f32 %v281
    %v290 = vcvt.s32.f32 %v282
    %v291 = vcvt.s32.f32 %v283
    %v292 = vlaneseq
    %v293 = vshrl.u32 %v292, 7
    %v294 = vsub.s32 0, %v293
    %v295 = vrot.slane %v33, %v294
    %vm296 = vcmp.le.s32.totalorder %v242, %v295
    %vm297 = vcmp.le.s32.totalorder %v245, %v295
    %vm298 = vcmp.le.s32.totalorder %v248, %v295
    %vm299 = vcmp.le.s32.totalorder %v251, %v295
    %vm300 = vcmp.le.s32.totalorder %v254, %v295
    %vm301 = vcmp.le.s32.totalorder %v257, %v295
    %vm302 = vcmp.le.s32.totalorder %v260, %v295
    %vm303 = vcmp.le.s32.totalorder %v263, %v295
    %v304 = vsel %vm296, 1, 0
    %v305 = vsel %vm297, 1, 0
    %v306 = vsel %vm298, 1, 0
    %v307 = vsel %vm299, 1, 0
    %v308 = vsel %vm300, 1, 0
    %v309 = vsel %vm301, 1, 0
    %v310 = vsel %vm302, 1, 0
    %v311 = vsel %vm303, 1, 0
    %v312 = vcvt.s32.f32 %v304
    %v313 = vcvt.s32.f32 %v305
    %v314 = vcvt.s32.f32 %v306
    %v315 = vcvt.s32.f32 %v307
    %v316 = vcvt.s32.f32 %v308
    %v317 = vcvt.s32.f32 %v309
    %v318 = vcvt.s32.f32 %v310
    %v319 = vcvt.s32.f32 %v311
    %v320 = vsub.f32 %v284, %v312
    %v321 = vsub.f32 %v285, %v313
    %v322 = vsub.f32 %v286, %v314
    %v323 = vsub.f32 %v287, %v315
    %v324 = vsub.f32 %v288, %v316
    %v325 = vsub.f32 %v289, %v317
    %v326 = vsub.f32 %v290, %v318
    %v327 = vsub.f32 %v291, %v319
    %328 = vset.pattern.permute.xlu0 0
    %329 = vperm.xlu0 %328, %v34
    %v330 = vpop.permute.xlu0 %329
    %331 = vset.pattern.permute.xlu0 0
    %332 = vperm.xlu0 %331, %v35
    %v333 = vpop.permute.xlu0 %332
    %334 = vset.pattern.permute.xlu0 0
    %335 = vperm.xlu0 %334, %v36
    %v336 = vpop.permute.xlu0 %335
    %337 = vset.pattern.permute.xlu0 0
    %338 = vperm.xlu0 %337, %v37
    %v339 = vpop.permute.xlu0 %338
    %340 = vset.pattern.permute.xlu0 0
    %341 = vperm.xlu0 %340, %v38
    %v342 = vpop.permute.xlu0 %341
    %343 = vset.pattern.permute.xlu0 0
    %344 = vperm.xlu0 %343, %v39
    %v345 = vpop.permute.xlu0 %344
    %346 = vset.pattern.permute.xlu0 0
    %347 = vperm.xlu0 %346, %v40
    %v348 = vpop.permute.xlu0 %347
    %349 = vset.pattern.permute.xlu0 0
    %350 = vperm.xlu0 %349, %v41
    %v351 = vpop.permute.xlu0 %350
    %v352 = vlaneseq
    %v353 = vshrl.u32 %v352, 7
    %v354 = vsub.s32 0, %v353
    %v355 = vrot.slane %v50, %v354
    %vm356 = vcmp.eq.s32.totalorder %v330, %v355
    %vm357 = vcmp.eq.s32.totalorder %v333, %v355
    %vm358 = vcmp.eq.s32.totalorder %v336, %v355
    %vm359 = vcmp.eq.s32.totalorder %v339, %v355
    %vm360 = vcmp.eq.s32.totalorder %v342, %v355
    %vm361 = vcmp.eq.s32.totalorder %v345, %v355
    %vm362 = vcmp.eq.s32.totalorder %v348, %v355
    %vm363 = vcmp.eq.s32.totalorder %v351, %v355
    %v364 = vsel %vm356, %v320, 0.0
    %v365 = vsel %vm357, %v321, 0.0
    %v366 = vsel %vm358, %v322, 0.0
    %v367 = vsel %vm359, %v323, 0.0
    %v368 = vsel %vm360, %v324, 0.0
    %v369 = vsel %vm361, %v325, 0.0
    %v370 = vsel %vm362, %v326, 0.0
    %v371 = vsel %vm363, %v327, 0.0
    %372 = vxpose.xlu0.b32.start [1/16] %v364, 128
    %373 = vxpose.xlu0.b32.cont [2/16] %v365, 128
    %374 = vxpose.xlu0.b32.cont [3/16] %v366, 128
    %375 = vxpose.xlu0.b32.cont [4/16] %v367, 128
    %376 = vxpose.xlu0.b32.cont [5/16] %v368, 128
    %377 = vxpose.xlu0.b32.cont [6/16] %v369, 128
    %378 = vxpose.xlu0.b32.cont [7/16] %v370, 128
    %379 = vxpose.xlu0.b32.cont [8/16] %v371, 128
    %380 = vxpose.xlu0.b32.cont [9/16] 0.0, 128
    %381 = vxpose.xlu0.b32.cont [10/16] 0.0, 128
    %382 = vxpose.xlu0.b32.cont [11/16] 0.0, 128
    %383 = vxpose.xlu0.b32.cont [12/16] 0.0, 128
    %384 = vxpose.xlu0.b32.cont [13/16] 0.0, 128
    %385 = vxpose.xlu0.b32.cont [14/16] 0.0, 128
    %386 = vxpose.xlu0.b32.cont [15/16] 0.0, 128
    %387 = vxpose.xlu0.b32.end [16/16] 0.0, 128
    %v388 = vpop.trf.xlu0
    %v389 = vpop.trf.xlu0
    %v390 = vpop.trf.xlu0
    %v391 = vpop.trf.xlu0
    %v392 = vpop.trf.xlu0
    %v393 = vpop.trf.xlu0
    %v394 = vpop.trf.xlu0
    %v395 = vpop.trf.xlu0
    %v396 = vpop.trf.xlu0
    %v397 = vpop.trf.xlu0
    %v398 = vpop.trf.xlu0
    %v399 = vpop.trf.xlu0
    %v400 = vpop.trf.xlu0
    %v401 = vpop.trf.xlu0
    %v402 = vpop.trf.xlu0
    %v403 = vpop.trf.xlu0
    %vm404 = vcmask 523264
    %v406 = vsel %vm404, %v388, 0
    %v409 = vsel %vm404, %v389, 0
    %v412 = vsel %vm404, %v390, 0
    %v415 = vsel %vm404, %v391, 0
    %417 = vmatprep.subr.mxu0 0.0
    %418 = vmatpush1.msra.mxu0 %v202
    %419 = vmatprep.subr.mxu0 0.0
    %420 = vmatpush1.msra.mxu0 %v207
    %421 = vmatprep.subr.mxu0 0.0
    %422 = vmatpush1.msra.mxu0 %v212
    %423 = vmatprep.subr.mxu0 0.0
    %424 = vmatpush1.msra.mxu0 %v217
    %425 = vmatprep.subr.mxu0 0.0
    %426 = vmatpush1.msra.mxu0 %v222
    %427 = vmatprep.subr.mxu0 0.0
    %428 = vmatpush1.msra.mxu0 %v227
    %429 = vmatprep.subr.mxu0 0.0
    %430 = vmatpush1.msra.mxu0 %v232
    %431 = vmatprep.subr.mxu0 0.0
    %432 = vmatpush1.msra.mxu0 %v237
    %433 = vmatprep.subr.mxu0 0.0
    %434 = vmatpush1.msra.mxu0 0.0
    %435 = vmatprep.subr.mxu0 0.0
    %436 = vmatpush1.msra.mxu0 0.0
    %437 = vmatprep.subr.mxu0 0.0
    %438 = vmatpush1.msra.mxu0 0.0
    %439 = vmatprep.subr.mxu0 0.0
    %440 = vmatpush1.msra.mxu0 0.0
    %441 = vmatprep.subr.mxu0 0.0
    %442 = vmatpush1.msra.mxu0 0.0
    %443 = vmatprep.subr.mxu0 0.0
    %444 = vmatpush1.msra.mxu0 0.0
    %445 = vmatprep.subr.mxu0 0.0
    %446 = vmatpush1.msra.mxu0 0.0
    %447 = vmatprep.subr.mxu0 0.0
    %448 = vmatpush1.msra.mxu0 0.0
    %449 = vmatprep.subr.mxu0 0.0
    %450 = vmatpush1.msra.mxu0 0.0
    %451 = vmatprep.subr.mxu0 0.0
    %452 = vmatpush1.msra.mxu0 0.0
    %453 = vmatprep.subr.mxu0 0.0
    %454 = vmatpush1.msra.mxu0 0.0
    %455 = vmatprep.subr.mxu0 0.0
    %456 = vmatpush1.msra.mxu0 0.0
    %457 = vmatprep.subr.mxu0 0.0
    %458 = vmatpush1.msra.mxu0 0.0
    %459 = vmatprep.subr.mxu0 0.0
    %460 = vmatpush1.msra.mxu0 0.0
    %461 = vmatprep.subr.mxu0 0.0
    %462 = vmatpush1.msra.mxu0 0.0
    %463 = vmatprep.subr.mxu0 0.0
    %464 = vmatpush1.msra.mxu0 0.0
    %465 = vmatprep.subr.mxu0 0.0
    %466 = vmatpush1.msra.mxu0 0.0
    %467 = vmatprep.subr.mxu0 0.0
    %468 = vmatpush1.msra.mxu0 0.0
    %469 = vmatprep.subr.mxu0 0.0
    %470 = vmatpush1.msra.mxu0 0.0
    %471 = vmatprep.subr.mxu0 0.0
    %472 = vmatpush1.msra.mxu0 0.0
    %473 = vmatprep.subr.mxu0 0.0
    %474 = vmatpush1.msra.mxu0 0.0
    %475 = vmatprep.subr.mxu0 0.0
    %476 = vmatpush1.msra.mxu0 0.0
    %477 = vmatprep.subr.mxu0 0.0
    %478 = vmatpush1.msra.mxu0 0.0
    %479 = vmatprep.subr.mxu0 0.0
    %480 = vmatpush1.msra.mxu0 0.0
    %481 = vmatprep.mubr.f32.mxu0 0.0
    %482 = vmatmul.mubr.f32.gmra.mrb[0].mxu0 %v406
    %v483 = vpop.f32.mrb[0].mxu0
    %v484 = vadd.f32 0.0, %v483
    %v485 = vpop.f32.mrb[0].mxu0
    %486 = vmatprep.mubr.f32.mxu0 0.0
    %487 = vmatmul.mubr.f32.gmra.mrb[0].mxu0 %v409
    %v488 = vpop.f32.mrb[0].mxu0
    %v489 = vadd.f32 0.0, %v488
    %v490 = vpop.f32.mrb[0].mxu0
    %491 = vmatprep.mubr.f32.mxu0 0.0
    %492 = vmatmul.mubr.f32.gmra.mrb[0].mxu0 %v412
    %v493 = vpop.f32.mrb[0].mxu0
    %v494 = vadd.f32 0.0, %v493
    %v495 = vpop.f32.mrb[0].mxu0
    %496 = vmatprep.mubr.f32.mxu0 0.0
    %497 = vmatmul.mubr.f32.gmra.mrb[0].mxu0 %v415
    %v498 = vpop.f32.mrb[0].mxu0
    %v499 = vadd.f32 0.0, %v498
    %v500 = vpop.f32.mrb[0].mxu0
    %501 = vdwg.mxu0
    %vm502 = vcmp.eq.s32.totalorder %v52, %v355
    %v503 = vsel %vm502, 1, 0
    %v504 = vcvt.s32.f32 %v503
    %v506 = vsel %vm110, %v504, 0
    %508 = vmatprep.subr.mxu0 0.0
    %509 = vmatpush1.msra.mxu0 %v484
    %510 = vmatprep.subr.mxu0 0.0
    %511 = vmatpush1.msra.mxu0 %v489
    %512 = vmatprep.subr.mxu0 0.0
    %513 = vmatpush1.msra.mxu0 %v494
    %514 = vmatprep.subr.mxu0 0.0
    %515 = vmatpush1.msra.mxu0 %v499
    %516 = vmatprep.subr.mxu0 0.0
    %517 = vmatpush1.msra.mxu0 0.0
    %518 = vmatprep.subr.mxu0 0.0
    %519 = vmatpush1.msra.mxu0 0.0
    %520 = vmatprep.subr.mxu0 0.0
    %521 = vmatpush1.msra.mxu0 0.0
    %522 = vmatprep.subr.mxu0 0.0
    %523 = vmatpush1.msra.mxu0 0.0
    %524 = vmatprep.subr.mxu0 0.0
    %525 = vmatpush1.msra.mxu0 0.0
    %526 = vmatprep.subr.mxu0 0.0
    %527 = vmatpush1.msra.mxu0 0.0
    %528 = vmatprep.subr.mxu0 0.0
    %529 = vmatpush1.msra.mxu0 0.0
    %530 = vmatprep.subr.mxu0 0.0
    %531 = vmatpush1.msra.mxu0 0.0
    %532 = vmatprep.subr.mxu0 0.0
    %533 = vmatpush1.msra.mxu0 0.0
    %534 = vmatprep.subr.mxu0 0.0
    %535 = vmatpush1.msra.mxu0 0.0
    %536 = vmatprep.subr.mxu0 0.0
    %537 = vmatpush1.msra.mxu0 0.0
    %538 = vmatprep.subr.mxu0 0.0
    %539 = vmatpush1.msra.mxu0 0.0
    %540 = vmatprep.subr.mxu0 0.0
    %541 = vmatpush1.msra.mxu0 0.0
    %542 = vmatprep.subr.mxu0 0.0
    %543 = vmatpush1.msra.mxu0 0.0
    %544 = vmatprep.subr.mxu0 0.0
    %545 = vmatpush1.msra.mxu0 0.0
    %546 = vmatprep.subr.mxu0 0.0
    %547 = vmatpush1.msra.mxu0 0.0
    %548 = vmatprep.subr.mxu0 0.0
    %549 = vmatpush1.msra.mxu0 0.0
    %550 = vmatprep.subr.mxu0 0.0
    %551 = vmatpush1.msra.mxu0 0.0
    %552 = vmatprep.subr.mxu0 0.0
    %553 = vmatpush1.msra.mxu0 0.0
    %554 = vmatprep.subr.mxu0 0.0
    %555 = vmatpush1.msra.mxu0 0.0
    %556 = vmatprep.subr.mxu0 0.0
    %557 = vmatpush1.msra.mxu0 0.0
    %558 = vmatprep.subr.mxu0 0.0
    %559 = vmatpush1.msra.mxu0 0.0
    %560 = vmatprep.subr.mxu0 0.0
    %561 = vmatpush1.msra.mxu0 0.0
    %562 = vmatprep.subr.mxu0 0.0
    %563 = vmatpush1.msra.mxu0 0.0
    %564 = vmatprep.subr.mxu0 0.0
    %565 = vmatpush1.msra.mxu0 0.0
    %566 = vmatprep.subr.mxu0 0.0
    %567 = vmatpush1.msra.mxu0 0.0
    %568 = vmatprep.subr.mxu0 0.0
    %569 = vmatpush1.msra.mxu0 0.0
    %570 = vmatprep.subr.mxu0 0.0
    %571 = vmatpush1.msra.mxu0 0.0
    %572 = vmatprep.mubr.f32.mxu0 0.0
    %573 = vmatmul.mubr.f32.gmra.mrb[0].mxu0 %v506
    %v574 = vpop.f32.mrb[0].mxu0
    %v575 = vadd.f32 0.0, %v574
    %v576 = vpop.f32.mrb[0].mxu0
    %577 = vdwg.mxu0
    %v578 = vmul.f32 %v484, %v484
    %v579 = vmul.f32 %v489, %v489
    %v580 = vmul.f32 %v494, %v494
    %v581 = vmul.f32 %v499, %v499
    %582 = vmatprep.subr.mxu0 0.0
    %583 = vmatpush1.msra.mxu0 %v578
    %584 = vmatprep.subr.mxu0 0.0
    %585 = vmatpush1.msra.mxu0 %v579
    %586 = vmatprep.subr.mxu0 0.0
    %587 = vmatpush1.msra.mxu0 %v580
    %588 = vmatprep.subr.mxu0 0.0
    %589 = vmatpush1.msra.mxu0 %v581
    %590 = vmatprep.subr.mxu0 0.0
    %591 = vmatpush1.msra.mxu0 0.0
    %592 = vmatprep.subr.mxu0 0.0
    %593 = vmatpush1.msra.mxu0 0.0
    %594 = vmatprep.subr.mxu0 0.0
    %595 = vmatpush1.msra.mxu0 0.0
    %596 = vmatprep.subr.mxu0 0.0
    %597 = vmatpush1.msra.mxu0 0.0
    %598 = vmatprep.subr.mxu0 0.0
    %599 = vmatpush1.msra.mxu0 0.0
    %600 = vmatprep.subr.mxu0 0.0
    %601 = vmatpush1.msra.mxu0 0.0
    %602 = vmatprep.subr.mxu0 0.0
    %603 = vmatpush1.msra.mxu0 0.0
    %604 = vmatprep.subr.mxu0 0.0
    %605 = vmatpush1.msra.mxu0 0.0
    %606 = vmatprep.subr.mxu0 0.0
    %607 = vmatpush1.msra.mxu0 0.0
    %608 = vmatprep.subr.mxu0 0.0
    %609 = vmatpush1.msra.mxu0 0.0
    %610 = vmatprep.subr.mxu0 0.0
    %611 = vmatpush1.msra.mxu0 0.0
    %612 = vmatprep.subr.mxu0 0.0
    %613 = vmatpush1.msra.mxu0 0.0
    %614 = vmatprep.subr.mxu0 0.0
    %615 = vmatpush1.msra.mxu0 0.0
    %616 = vmatprep.subr.mxu0 0.0
    %617 = vmatpush1.msra.mxu0 0.0
    %618 = vmatprep.subr.mxu0 0.0
    %619 = vmatpush1.msra.mxu0 0.0
    %620 = vmatprep.subr.mxu0 0.0
    %621 = vmatpush1.msra.mxu0 0.0
    %622 = vmatprep.subr.mxu0 0.0
    %623 = vmatpush1.msra.mxu0 0.0
    %624 = vmatprep.subr.mxu0 0.0
    %625 = vmatpush1.msra.mxu0 0.0
    %626 = vmatprep.subr.mxu0 0.0
    %627 = vmatpush1.msra.mxu0 0.0
    %628 = vmatprep.subr.mxu0 0.0
    %629 = vmatpush1.msra.mxu0 0.0
    %630 = vmatprep.subr.mxu0 0.0
    %631 = vmatpush1.msra.mxu0 0.0
    %632 = vmatprep.subr.mxu0 0.0
    %633 = vmatpush1.msra.mxu0 0.0
    %634 = vmatprep.subr.mxu0 0.0
    %635 = vmatpush1.msra.mxu0 0.0
    %636 = vmatprep.subr.mxu0 0.0
    %637 = vmatpush1.msra.mxu0 0.0
    %638 = vmatprep.subr.mxu0 0.0
    %639 = vmatpush1.msra.mxu0 0.0
    %640 = vmatprep.subr.mxu0 0.0
    %641 = vmatpush1.msra.mxu0 0.0
    %642 = vmatprep.subr.mxu0 0.0
    %643 = vmatpush1.msra.mxu0 0.0
    %644 = vmatprep.subr.mxu0 0.0
    %645 = vmatpush1.msra.mxu0 0.0
    %646 = vmatprep.mubr.f32.mxu0 0.0
    %647 = vmatmul.mubr.f32.gmra.mrb[0].mxu0 %v506
    %v648 = vpop.f32.mrb[0].mxu0
    %v649 = vadd.f32 0.0, %v648
    %v650 = vpop.f32.mrb[0].mxu0
    %651 = vdwg.mxu0
    %v652 = vlaneseq
    %v653 = vand.u32 %v652, 127
    %vm654 = vcmp.lt.s32.totalorder %v653, 8
    %v655 = vsel %vm654, 1, 0
    %v656 = vcvt.s32.f32 %v655
    %v657 = vmul.f32 %v575, %v575
    %v658 = vsub.f32 %v657, %v649
    %v659 = vmul.f32 %v658, 0.5
    %v660 = vmul.f32 %v659, %v656
    %v661 = vsub.f32 1.0, %v656
    %v662 = vmul.f32 %v575, %v661
    %v663 = vadd.f32 %v660, %v662
    %vm664 = vcmask 72704
    %v666 = vsel %vm664, 1.0, 0
    %v669 = vsel %vm664, %v663, 0
    %671 = vmatprep.subr.mxu0 0.0
    %672 = vmatpush1.xpose.msra.mxu0 %v669
    %673 = vmatprep.subr.mxu0 0.0
    %674 = vmatpush1.xpose.msra.mxu0 0.0
    %675 = vmatprep.subr.mxu0 0.0
    %676 = vmatpush1.xpose.msra.mxu0 0.0
    %677 = vmatprep.subr.mxu0 0.0
    %678 = vmatpush1.xpose.msra.mxu0 0.0
    %679 = vmatprep.subr.mxu0 0.0
    %680 = vmatpush1.xpose.msra.mxu0 0.0
    %681 = vmatprep.subr.mxu0 0.0
    %682 = vmatpush1.xpose.msra.mxu0 0.0
    %683 = vmatprep.subr.mxu0 0.0
    %684 = vmatpush1.xpose.msra.mxu0 0.0
    %685 = vmatprep.subr.mxu0 0.0
    %686 = vmatpush1.xpose.msra.mxu0 0.0
    %687 = vmatprep.subr.mxu0 0.0
    %688 = vmatpush1.xpose.msra.mxu0 0.0
    %689 = vmatprep.subr.mxu0 0.0
    %690 = vmatpush1.xpose.msra.mxu0 0.0
    %691 = vmatprep.subr.mxu0 0.0
    %692 = vmatpush1.xpose.msra.mxu0 0.0
    %693 = vmatprep.subr.mxu0 0.0
    %694 = vmatpush1.xpose.msra.mxu0 0.0
    %695 = vmatprep.subr.mxu0 0.0
    %696 = vmatpush1.xpose.msra.mxu0 0.0
    %697 = vmatprep.subr.mxu0 0.0
    %698 = vmatpush1.xpose.msra.mxu0 0.0
    %699 = vmatprep.subr.mxu0 0.0
    %700 = vmatpush1.xpose.msra.mxu0 0.0
    %701 = vmatprep.subr.mxu0 0.0
    %702 = vmatpush1.xpose.msra.mxu0 0.0
    %703 = vmatprep.subr.mxu0 0.0
    %704 = vmatpush1.xpose.msra.mxu0 0.0
    %705 = vmatprep.subr.mxu0 0.0
    %706 = vmatpush1.xpose.msra.mxu0 0.0
    %707 = vmatprep.subr.mxu0 0.0
    %708 = vmatpush1.xpose.msra.mxu0 0.0
    %709 = vmatprep.subr.mxu0 0.0
    %710 = vmatpush1.xpose.msra.mxu0 0.0
    %711 = vmatprep.subr.mxu0 0.0
    %712 = vmatpush1.xpose.msra.mxu0 0.0
    %713 = vmatprep.subr.mxu0 0.0
    %714 = vmatpush1.xpose.msra.mxu0 0.0
    %715 = vmatprep.subr.mxu0 0.0
    %716 = vmatpush1.xpose.msra.mxu0 0.0
    %717 = vmatprep.subr.mxu0 0.0
    %718 = vmatpush1.xpose.msra.mxu0 0.0
    %719 = vmatprep.subr.mxu0 0.0
    %720 = vmatpush1.xpose.msra.mxu0 0.0
    %721 = vmatprep.subr.mxu0 0.0
    %722 = vmatpush1.xpose.msra.mxu0 0.0
    %723 = vmatprep.subr.mxu0 0.0
    %724 = vmatpush1.xpose.msra.mxu0 0.0
    %725 = vmatprep.subr.mxu0 0.0
    %726 = vmatpush1.xpose.msra.mxu0 0.0
    %727 = vmatprep.subr.mxu0 0.0
    %728 = vmatpush1.xpose.msra.mxu0 0.0
    %729 = vmatprep.subr.mxu0 0.0
    %730 = vmatpush1.xpose.msra.mxu0 0.0
    %731 = vmatprep.subr.mxu0 0.0
    %732 = vmatpush1.xpose.msra.mxu0 0.0
    %733 = vmatprep.subr.mxu0 0.0
    %734 = vmatpush1.xpose.msra.mxu0 0.0
    %735 = vmatprep.mubr.f32.mxu0 0.0
    %736 = vmatmul.mubr.f32.gmra.mrb[0].mxu0 %v666
    %v737 = vpop.f32.mrb[0].mxu0
    %v738 = vadd.f32 0.0, %v737
    %v739 = vpop.f32.mrb[0].mxu0
    %740 = vdwg.mxu0
    %vm741 = vcmask 57344
    %742 = vst.msk [vmem:[#allocation2] sm:$0x1] %vm741, %v738
    // Predicated region
    $region34: #{tpu_custom_call.1} parent=1 // pred_check
      _
    $region35: #{tpu_custom_call.1} parent=1 // pred_check_branch
      %744 = sbr.rel (0) target = $region37
    $region36: #{tpu_custom_call.1} parent=1 // pred_region
      %s746 = ssub.s32 16, 16
      %747 = vsyncadd [#allocation3], %s746
      %s749 = sshll.u32 [#allocation2], 4
      %s750 = int_to_ptr.vmem [resolvable:$true] %s749
      %752 = dma.vmem_to_hbm [thread:$0]  %s750, 16, %s8, [#allocation3]
    $region37: #{tpu_custom_call.1} parent=1 // pred_fallthru
      _
    // Predicated region
    $region38: #{tpu_custom_call.1} parent=1 // pred_check
      _
    $region39: #{tpu_custom_call.1} parent=1 // pred_check_branch
      %754 = sbr.rel (0) target = $region41
    $region40: #{tpu_custom_call.1} parent=1 // pred_region
      %755 = dma.done [#allocation3], 16
    $region41: #{tpu_custom_call.1} parent=1 // pred_fallthru
      _
    %756 = vsyncpa [#allocation3], 1

</llo_original>
